<compile_context>
chip_gen: v5e
topology: v5e:2x2
jax: 0.10.0
libtpu: 0.0.40
codegen_flags: <defaults>
</compile_context>

<pallas_src>
import math

import jax
import jax.numpy as jnp
from jax import lax
from jax.experimental import pallas as pl
from jax.experimental.pallas import tpu as pltpu

_LANE = 128
_INV_SQRT2 = 1.0 / math.sqrt(2.0)


def _make_gelu_kernel(cheap_in_input_dtype):
    """Exact GELU: x * 0.5 * (1 + erf(x / sqrt(2))) == 0.5*x + 0.5*x*erf(x/sqrt(2))."""

    def kernel(x_ref, o_ref):
        x = x_ref[...]
        # erf stays in f32 (accuracy; transcendental pieces ride the EUP slot).
        erf_t = lax.erf(x.astype(jnp.float32) * jnp.float32(_INV_SQRT2))
        if cheap_in_input_dtype:
            # bf16 VPU path (v6e/v7x): packed 2-per-lane mul/add, erf kept in f32.
            half_x = x * jnp.asarray(0.5, x.dtype)
            y = half_x + half_x * erf_t.astype(x.dtype)
        else:
            xf = x.astype(jnp.float32)
            half_x = xf * jnp.float32(0.5)
            y = half_x + half_x * erf_t
        o_ref[...] = y.astype(o_ref.dtype)

    return kernel


def _chip_facts():
    """(num_tensorcores, vmem_capacity_bytes, has_bf16_vpu) — all best-effort."""
    vmem_cap = 128 << 20
    num_cores = 1
    has_bf16_vpu = True
    try:
        info = pltpu.get_tpu_info()
        vmem_cap = int(getattr(info, "vmem_capacity_bytes", vmem_cap))
    except Exception:
        pass
    try:
        kind = jax.devices()[0].device_kind.lower()
        if ("v5 lite" in kind) or ("v5e" in kind) or ("v5lite" in kind):
            has_bf16_vpu = False  # v5e VPU has no bf16 path — keep everything f32 there
        if "v7" in kind:
            num_cores = 2  # v7x: 2 TensorCores per chip
    except Exception:
        pass
    # The 64-MiB-VMEM generation (v7x, per-TensorCore) also implies 2 cores even if
    # device_kind is opaque; clamp so a per-chip (128 MiB) report can't mislead tiling.
    if vmem_cap <= (64 << 20):
        num_cores = max(num_cores, 2)
    return num_cores, vmem_cap, has_bf16_vpu


def _choose_tile_rows(nrows, ncols, itemsize, sublane_mult, num_cores):
    if nrows <= sublane_mult:
        return nrows  # single full-extent block (tiling rule: dim == full extent)
    # ~8 MiB blocks on every generation: big enough that the ~0.35 us/grid-step
    # overhead is noise even at v7x's 3.2 TB/s, small enough that 2 arrays x 2
    # pipeline buffers fit comfortably under v7x's 64 MiB physical VMEM.
    block_budget = 8 << 20
    budget_rows = max(
        sublane_mult,
        (block_budget // (ncols * itemsize)) // sublane_mult * sublane_mult,
    )
    # Never collapse to one grid step when splittable: >=4 steps restores DMA/compute
    # overlap, >=2*num_cores lets megacore shard the row axis on v7x.
    min_steps = max(4, 2 * num_cores)
    steps_cap = nrows // sublane_mult
    target_steps = max(1, min(min_steps, steps_cap))
    rows_for_steps = max(
        sublane_mult, (nrows // target_steps) // sublane_mult * sublane_mult
    )
    tile_rows = min(budget_rows, rows_for_steps, nrows)
    # Snap down to a divisor of nrows (still a multiple of sublane_mult) so the
    # last block's stores stay unmasked.
    d = max(sublane_mult, tile_rows // sublane_mult * sublane_mult)
    while d > sublane_mult and nrows % d != 0:
        d -= sublane_mult
    if nrows % d == 0:
        tile_rows = d
    return tile_rows


def _gelu_2d(x2, num_cores, vmem_cap, has_bf16_vpu):
    """Run the GELU kernel on a lane-dense 2-D slab (ncols multiple of 128)."""
    nrows, ncols = x2.shape
    itemsize = jnp.dtype(x2.dtype).itemsize
    sublane_mult = 8 * max(1, 4 // max(itemsize, 1))  # 8 f32, 16 bf16, 32 int8
    tile_rows = _choose_tile_rows(nrows, ncols, itemsize, sublane_mult, num_cores)
    grid_steps = pl.cdiv(nrows, tile_rows)

    block_bytes = tile_rows * ncols * itemsize
    # 2 arrays x 2 pipeline buffers of the block + headroom; cap at ~40 MiB so we
    # stay >20 MiB under v7x's 64 MiB physical VMEM while not strangling 8 MiB blocks.
    vmem_limit = 4 * block_bytes + (4 << 20)
    vmem_limit = int(
        min(max(vmem_limit, 16 << 20), 40 << 20, max(vmem_cap - (16 << 20), 16 << 20))
    )

    cheap_in_input_dtype = (x2.dtype == jnp.bfloat16) and has_bf16_vpu
    kernel = _make_gelu_kernel(cheap_in_input_dtype)

    # Prefer CORE_PARALLEL on multi-TensorCore chips (v7x) so the row axis is
    # provably sharded across both cores; fall back to PARALLEL if rejected.
    semantics_candidates = []
    if num_cores > 1 and grid_steps >= num_cores and grid_steps % num_cores == 0:
        semantics_candidates.append((pltpu.CORE_PARALLEL,))
    semantics_candidates.append((pltpu.PARALLEL,))

    last_err = None
    for semantics in semantics_candidates:
        call = pl.pallas_call(
            kernel,
            out_shape=jax.ShapeDtypeStruct((nrows, ncols), x2.dtype),
            grid_spec=pltpu.PrefetchScalarGridSpec(
                num_scalar_prefetch=0,
                grid=(grid_steps,),
                in_specs=[pl.BlockSpec((tile_rows, ncols), lambda i: (i, 0))],
                out_specs=pl.BlockSpec((tile_rows, ncols), lambda i: (i, 0)),
            ),
            compiler_params=pltpu.CompilerParams(
                dimension_semantics=semantics,
                vmem_limit_bytes=vmem_limit,
            ),
        )
        try:
            return call(x2)
        except Exception as e:  # fall back only if CORE_PARALLEL is rejected
            last_err = e
    raise last_err


def gelu_pallas(x):
    orig_shape = x.shape
    total = int(x.size)
    if total == 0:
        return x
    num_cores, vmem_cap, has_bf16_vpu = _chip_facts()
    flat = x.reshape(-1)

    aligned = (total // _LANE) * _LANE
    if aligned == 0:
        # Tiny tensor (<128 elements): a kernel launch is pure overhead.
        return jax.nn.gelu(x, approximate=False).astype(x.dtype)

    def widest_cols(n):
        # Widest power-of-two column count that keeps the slab lane-dense and
        # leaves >= 8 rows (lane-dense output is the biggest single lever).
        ncols = _LANE
        while (n % (ncols * 2) == 0) and ncols < 8192 and (n // (ncols * 2)) >= 8:
            ncols *= 2
        return ncols

    if aligned == total:
        ncols = widest_cols(total)
        out2 = _gelu_2d(
            flat.reshape(total // ncols, ncols), num_cores, vmem_cap, has_bf16_vpu
        )
        return out2.reshape(orig_shape)

    # Non-multiple-of-128: lane-dense kernel on the aligned prefix, plain XLA gelu
    # on the (<128-element) tail — no padded copy of the whole array materialized.
    ncols = widest_cols(aligned)
    head = _gelu_2d(
        flat[:aligned].reshape(aligned // ncols, ncols),
        num_cores,
        vmem_cap,
        has_bf16_vpu,
    )
    tail = jax.nn.gelu(flat[aligned:], approximate=False).astype(x.dtype)
    return jnp.concatenate([head.reshape(-1), tail]).reshape(orig_shape)


if __name__ == "__main__":
    key = jax.random.PRNGKey(0)
    # Shape consistent with the module's forward (elementwise); NCHW-style small shape.
    x = jax.random.normal(key, (2, 4, 16, 16), dtype=jnp.float32)

    y = gelu_pallas(x)
    jax.block_until_ready(y)

    y_ref = jax.nn.gelu(x, approximate=False)
    assert y.shape == x.shape and y.dtype == x.dtype
    assert jnp.allclose(y, y_ref, atol=1e-5, rtol=1e-5), "mismatch vs reference GELU"

    # Also exercise the non-128-multiple path (aligned prefix kernel + XLA tail).
    x2 = jax.random.normal(jax.random.PRNGKey(1), (3, 5, 13), dtype=jnp.float32)
    y2 = gelu_pallas(x2)
    jax.block_until_ready(y2)
    assert jnp.allclose(
        y2, jax.nn.gelu(x2, approximate=False), atol=1e-5, rtol=1e-5
    ), "mismatch vs reference GELU (unaligned tail path)"

    print("KERNEL_OK")
</pallas_src>

<mosaic_0001>
module attributes {stable_mosaic.version = 11 : i64} {
  func.func @kernel(%arg0: i32, %arg1: memref<8x256xf32, #tpu.memory_space<vmem>>, %arg2: memref<8x256xf32, #tpu.memory_space<vmem>>) attributes {dimension_semantics = [#tpu.dimension_semantics<parallel>], iteration_bounds = array<i64: 1>, scalar_prefetch = 0 : i64, scratch_operands = 0 : i64, tpu.core_type = #tpu.core_type<tc>, window_params = [{transform_indices = @transform_0, window_bounds = array<i64: 8, 256>}, {transform_indices = @transform_1, window_bounds = array<i64: 8, 256>}]} {
    %c0 = arith.constant 0 : index
    %c0_0 = arith.constant 0 : index
    %0 = vector.load %arg1[%c0, %c0_0] : memref<8x256xf32, #tpu.memory_space<vmem>>, vector<8x256xf32>
    %cst = arith.constant 0.707106769 : f32
    %1 = vector.broadcast %cst : f32 to vector<8x256xf32>
    %2 = arith.mulf %0, %1 : vector<8x256xf32>
    %3 = math.erf %2 : vector<8x256xf32>
    %cst_1 = arith.constant 5.000000e-01 : f32
    %4 = vector.broadcast %cst_1 : f32 to vector<8x256xf32>
    %5 = arith.mulf %0, %4 : vector<8x256xf32>
    %6 = arith.mulf %5, %3 : vector<8x256xf32>
    %7 = arith.addf %5, %6 : vector<8x256xf32>
    %c0_2 = arith.constant 0 : index
    %c0_3 = arith.constant 0 : index
    %8 = vector.load %arg2[%c0_2, %c0_3] : memref<8x256xf32, #tpu.memory_space<vmem>>, vector<8x256xf32>
    tpu.vector_store %arg2[%c0_2, %c0_3], %7 {strides = array<i32>} : memref<8x256xf32, #tpu.memory_space<vmem>>, vector<8x256xf32>,
    return
  }
  func.func @transform_0(%arg0: i32) -> (i32, i32) {
    %c0_i32 = arith.constant 0 : i32
    %c0_i32_0 = arith.constant 0 : i32
    return %arg0, %c0_i32 : i32, i32
  }
  func.func @transform_1(%arg0: i32) -> (i32, i32) {
    %c0_i32 = arith.constant 0 : i32
    %c0_i32_0 = arith.constant 0 : i32
    return %arg0, %c0_i32 : i32, i32
  }
}

</mosaic_0001>

<llo_original>
// kernel: tpu_custom_call.1
$region0: #{tpu_custom_call.1}
  #allocation0 [shape = 'u32[]', space=smem, size = 0x4, offset = 0x4, fixed_abs, tag = 'smem constant byte address 0x4 - core index']
  #allocation1 [shape = 'u32[72,128]{1,0:T(1,128)}', space=vmem, size = 0x9000, scoped, tag = 'internal scratch']
  %s0 = inlined_call_operand.hbm [shape: f32[8,256], index: 0, kind: input, shape index: {}]
  %s1 = inlined_call_operand.hbm [shape: f32[8,256], index: 1, kind: output, shape index: {}]
  %s2 = sld [smem:[#allocation0]]
  $region18: #{tpu_custom_call.1} parent=0
    _
  %s4 = ssub.s32 1, %s2
  %s5 = scalar_select 0, %s4, %s2
  $region1: #{tpu_custom_call.1} parent=0
    #allocation2 [shape = 'u8[8192]{0}', space=vmem, size = 0x2000, scoped, tag = 'input window, operand 0, single buffered']
    #allocation3 [shape = 's32[1]{0}', space=sflag, size = 0x4, scoped, tag = 'scoped memory for tpu_custom_call.1']
    #allocation4 [shape = 's32[1]{0}', space=sflag, size = 0x4, scoped, tag = 'scoped memory for tpu_custom_call.1']
    #allocation5 [shape = 'u8[8192]{0}', space=vmem, size = 0x2000, scoped, tag = 'output window, operand 0, single buffered']
    %6 = vsyncpa [#allocation3], 0
    %7 = vsyncpa [#allocation4], 0
    // Predicated region
    $region2: #{tpu_custom_call.1} parent=1 // pred_check
      _
    $region3: #{tpu_custom_call.1} parent=1 // pred_check_branch
      %9 = sbr.rel (0) target = $region5
    $region4: #{tpu_custom_call.1} parent=1 // pred_region
      %11 = vsyncadd [#allocation3], 0
      %s13 = sshll.u32 %s0, 4
      %s14 = int_to_ptr.hbm [resolvable:$true] %s13
      %s15 = sshll.u32 [#allocation2], 4
      %s16 = int_to_ptr.vmem [resolvable:$true] %s15
      %18 = dma.hbm_to_vmem [thread:$0]  %s14, 256, %s16, [#allocation3]
    $region5: #{tpu_custom_call.1} parent=1 // pred_fallthru
      _
    // Predicated region
    $region6: #{tpu_custom_call.1} parent=1 // pred_check
      _
    $region7: #{tpu_custom_call.1} parent=1 // pred_check_branch
      %20 = sbr.rel (0) target = $region9
    $region8: #{tpu_custom_call.1} parent=1 // pred_region
      %22 = dma.done [#allocation3], 256
    $region9: #{tpu_custom_call.1} parent=1 // pred_fallthru
      _
    %v23 = vld [vmem:[#allocation2] sm:$0xff]
    %v24 = vld [vmem:[#allocation2 + $0x8] sm:$0xff]
    %v25 = vmul.f32 %v23, 0.70710677
    %v26 = vmul.f32 %v24, 0.70710677
    %v27 = vmul.f32 %v25, %v25
    %v28 = vmin.f32 16.0, %v27
    %v29 = vmul.f32 %v28, 2.1237322e-06
    %v30 = vadd.f32 %v29, 0.00028619796
    %v31 = vmul.f32 %v28, %v30
    %v32 = vadd.f32 %v31, 0.0036580483
    %v33 = vmul.f32 %v28, %v32
    %v34 = vadd.f32 %v33, 0.05243302
    %v35 = vmul.f32 %v28, %v34
    %v36 = vadd.f32 %v35, 0.18741608
    %v37 = vmul.f32 %v28, %v36
    %v38 = vadd.f32 %v37, 1.1283791
    %v39 = vmul.f32 %v25, %v38
    %v40 = vmul.f32 %v28, 3.8918573e-05
    %v41 = vadd.f32 %v40, 0.001143296
    %v42 = vmul.f32 %v28, %v41
    %v43 = vadd.f32 %v42, 0.014752088
    %v44 = vmul.f32 %v28, %v43
    %v45 = vadd.f32 %v44, 0.112945676
    %v46 = vmul.f32 %v28, %v45
    %v47 = vadd.f32 %v46, 0.4994258
    %v48 = vmul.f32 %v28, %v47
    %v49 = vadd.f32 %v48, 1.0
    %v50 = vrcp.pop %v49
    %v51 = vmul.f32 %v49, %v50
    %v52 = vsub.f32 1.0, %v51
    %v53 = vmul.f32 %v50, %v52
    %v54 = vadd.f32 %v50, %v53
    %vm55 = vweird.f32 %v49
    %vm56 = vweird.f32 %v50
    %vm57 = vmor %vm55, %vm56
    %v58 = vsel %vm57, %v50, %v54
    %v59 = vand.u32 2147483647, %v49
    %vm60 = vcmp.eq.f32.partialorder %v59, 8.507059e+37
    %v61 = vand.u32 %v49, 2147483648
    %v62 = vor.u32 1.1754944e-38, %v61
    %v63 = vsel %vm60, %v62, %v58
    %v64 = vmul.f32 %v39, %v63
    %v65 = vmin.f32 %v64, 1.0
    %v66 = vmax.f32 %v65, -1.0
    %v67 = vmul.f32 %v26, %v26
    %v68 = vmin.f32 16.0, %v67
    %v69 = vmul.f32 %v68, 2.1237322e-06
    %v70 = vadd.f32 %v69, 0.00028619796
    %v71 = vmul.f32 %v68, %v70
    %v72 = vadd.f32 %v71, 0.0036580483
    %v73 = vmul.f32 %v68, %v72
    %v74 = vadd.f32 %v73, 0.05243302
    %v75 = vmul.f32 %v68, %v74
    %v76 = vadd.f32 %v75, 0.18741608
    %v77 = vmul.f32 %v68, %v76
    %v78 = vadd.f32 %v77, 1.1283791
    %v79 = vmul.f32 %v26, %v78
    %v80 = vmul.f32 %v68, 3.8918573e-05
    %v81 = vadd.f32 %v80, 0.001143296
    %v82 = vmul.f32 %v68, %v81
    %v83 = vadd.f32 %v82, 0.014752088
    %v84 = vmul.f32 %v68, %v83
    %v85 = vadd.f32 %v84, 0.112945676
    %v86 = vmul.f32 %v68, %v85
    %v87 = vadd.f32 %v86, 0.4994258
    %v88 = vmul.f32 %v68, %v87
    %v89 = vadd.f32 %v88, 1.0
    %v90 = vrcp.pop %v89
    %v91 = vmul.f32 %v89, %v90
    %v92 = vsub.f32 1.0, %v91
    %v93 = vmul.f32 %v90, %v92
    %v94 = vadd.f32 %v90, %v93
    %vm95 = vweird.f32 %v89
    %vm96 = vweird.f32 %v90
    %vm97 = vmor %vm95, %vm96
    %v98 = vsel %vm97, %v90, %v94
    %v99 = vand.u32 2147483647, %v89
    %vm100 = vcmp.eq.f32.partialorder %v99, 8.507059e+37
    %v101 = vand.u32 %v89, 2147483648
    %v102 = vor.u32 1.1754944e-38, %v101
    %v103 = vsel %vm100, %v102, %v98
    %v104 = vmul.f32 %v79, %v103
    %v105 = vmin.f32 %v104, 1.0
    %v106 = vmax.f32 %v105, -1.0
    %v107 = vmul.f32 %v23, 0.5
    %v108 = vmul.f32 %v24, 0.5
    %v109 = vmul.f32 %v107, %v66
    %v110 = vmul.f32 %v108, %v106
    %v111 = vadd.f32 %v107, %v109
    %v112 = vadd.f32 %v108, %v110
    %113 = vst [vmem:[#allocation5] sm:$0xff] %v111
    %114 = vst [vmem:[#allocation5 + $0x8] sm:$0xff] %v112
    // Predicated region
    $region10: #{tpu_custom_call.1} parent=1 // pred_check
      _
    $region11: #{tpu_custom_call.1} parent=1 // pred_check_branch
      %116 = sbr.rel (0) target = $region13
    $region12: #{tpu_custom_call.1} parent=1 // pred_region
      %118 = vsyncadd [#allocation4], 0
      %s120 = sshll.u32 [#allocation5], 4
      %s121 = int_to_ptr.vmem [resolvable:$true] %s120
      %s122 = sshll.u32 %s1, 4
      %s123 = int_to_ptr.hbm [resolvable:$true] %s122
      %125 = dma.vmem_to_hbm [thread:$0]  %s121, 256, %s123, [#allocation4]
    $region13: #{tpu_custom_call.1} parent=1 // pred_fallthru
      _
    // Predicated region
    $region14: #{tpu_custom_call.1} parent=1 // pred_check
      _
    $region15: #{tpu_custom_call.1} parent=1 // pred_check_branch
      %127 = sbr.rel (0) target = $region17
    $region16: #{tpu_custom_call.1} parent=1 // pred_region
      %129 = dma.done [#allocation4], 256
    $region17: #{tpu_custom_call.1} parent=1 // pred_fallthru
      _
    %130 = vsyncpa [#allocation3], 1
    %131 = vsyncpa [#allocation4], 1

</llo_original>
